<compile_context>
chip_gen: v6e
topology: v6e:2x2x1
jax: 0.10.0
libtpu: 0.0.40
codegen_flags: <defaults>
</compile_context>

<pallas_src>
import functools

import numpy as np

import jax
import jax.numpy as jnp
from jax.experimental import pallas as pl
from jax.experimental.pallas import tpu as pltpu

_CUTOFF_P = 6      # PolynomialCutoff exponent (nequip default, integer)
_LANES = 128       # TPU lane width


def _round_up(n: int, m: int) -> int:
    return ((n + m - 1) // m) * m


def _poly_cutoff(x):
    """PolynomialCutoff p=6 as an explicit multiply chain (no float pow)."""
    p = float(_CUTOFF_P)
    c1 = (p + 1.0) * (p + 2.0) / 2.0      # 28
    c2 = p * (p + 2.0)                    # 48
    c3 = p * (p + 1.0) / 2.0              # 21
    x2 = x * x
    x3 = x2 * x
    x6 = x3 * x3
    f = 1.0 - c1 * x6 + c2 * (x6 * x) - c3 * (x6 * x2)
    return jnp.where(x < 1.0, f, 0.0)


def _bessel_kernel_rec(x_ref, emb_ref, cut_ref):
    """Fast path: bessel weights are exactly 1..B (non-trainable default).

    x_ref  : (S, 128)      edges, dense over sublanes AND lanes
    emb_ref: (B, S, 128)   edge_embedding block (lane-dense)
    cut_ref: (S, 128)      edge_cutoff block
    """
    x = x_ref[...]
    cutoff = _poly_cutoff(x)
    cut_ref[...] = cutoff.astype(cut_ref.dtype)

    is_zero = x == 0.0
    safe_x = jnp.where(is_zero, 1.0, x)
    # sinc(n x) * n * cutoff = sin(pi n x) * cutoff / (pi x)
    inv = cutoff * pl.reciprocal(jnp.pi * safe_x)

    px = jnp.pi * x
    s_prev = jnp.zeros_like(x)            # sin(0 * pi x)
    s_cur = jnp.sin(px)                   # sin(1 * pi x)
    two_c = 2.0 * jnp.cos(px)             # Chebyshev recurrence multiplier

    num_b = emb_ref.shape[0]
    for n in range(1, num_b + 1):
        # x == 0: sinc(0) = 1 -> bessel = n -> emb = n * cutoff (cutoff(0)=1)
        emb_n = jnp.where(is_zero, float(n) * cutoff, s_cur * inv)
        emb_ref[n - 1] = emb_n.astype(emb_ref.dtype)
        if n < num_b:
            s_prev, s_cur = s_cur, two_c * s_cur - s_prev


def _bessel_kernel_generic(w_ref, x_ref, emb_ref, cut_ref):
    """Generic path: arbitrary (e.g. trained) bessel weights.

    w_ref  : (B,) float32 in SMEM (read as scalars)
    """
    x = x_ref[...]
    cutoff = _poly_cutoff(x)
    cut_ref[...] = cutoff.astype(cut_ref.dtype)

    is_zero = x == 0.0
    safe_x = jnp.where(is_zero, 1.0, x)
    inv = cutoff * pl.reciprocal(jnp.pi * safe_x)

    num_b = emb_ref.shape[0]
    for n in range(num_b):
        w_n = w_ref[n]
        s = jnp.sin((jnp.pi * w_n) * x)
        emb_n = jnp.where(is_zero, w_n * cutoff, s * inv)
        emb_ref[n] = emb_n.astype(emb_ref.dtype)


@functools.partial(
    jax.jit, static_argnames=("sublanes", "use_recurrence", "out_dtype")
)
def _encode_lane_dense(x, bessel_weights, *, sublanes, use_recurrence, out_dtype):
    """Returns lane-dense (edge_embedding [B, E], edge_cutoff [E])."""
    E = x.shape[0]
    B = bessel_weights.shape[-1]

    # Pad only to a lane multiple (128); partial last block is masked by Pallas.
    E_pad = _round_up(E, _LANES)
    xf = x.reshape(E).astype(jnp.float32)
    if E_pad != E:
        xf = jnp.pad(xf, (0, E_pad - E))          # pad value 0 -> finite outputs
    rows = E_pad // _LANES
    x2d = xf.reshape(rows, _LANES)                # free reshape, no transpose

    # Sublane tile: as big as requested (amortize ~0.35us/step overhead), but
    # aim for >=3-4 grid steps so the "parallel" axis shards across both v7x
    # TensorCores; never below 64 sublanes (~320 KiB/step) unless the graph is
    # tiny.  Always a multiple of 8.
    sublanes = int(sublanes)
    min_sub = min(64, sublanes)
    four_step = _round_up(pl.cdiv(rows, 4), 8)
    s = min(sublanes, max(min_sub, four_step))
    s = max(8, min(s, _round_up(rows, 8)))
    grid = (pl.cdiv(rows, s),)

    cost = pl.CostEstimate(
        flops=int((20 + 4 * B) * E_pad),
        transcendentals=int((2 if use_recurrence else B) * E_pad),
        bytes_accessed=int(4 * E_pad * (B + 2)),
    )

    x_spec = pl.BlockSpec((s, _LANES), lambda i: (i, 0))
    emb_spec = pl.BlockSpec((B, s, _LANES), lambda i: (0, i, 0))
    cut_spec = pl.BlockSpec((s, _LANES), lambda i: (i, 0))
    out_shapes = (
        jax.ShapeDtypeStruct((B, rows, _LANES), out_dtype),
        jax.ShapeDtypeStruct((rows, _LANES), out_dtype),
    )
    cparams = pltpu.CompilerParams(dimension_semantics=("parallel",))

    if use_recurrence:
        emb3, cut2 = pl.pallas_call(
            _bessel_kernel_rec,
            out_shape=out_shapes,
            grid_spec=pltpu.PrefetchScalarGridSpec(
                num_scalar_prefetch=0,
                grid=grid,
                in_specs=[x_spec],
                out_specs=[emb_spec, cut_spec],
            ),
            compiler_params=cparams,
            cost_estimate=cost,
        )(x2d)
    else:
        w1d = bessel_weights.reshape(B).astype(jnp.float32)
        emb3, cut2 = pl.pallas_call(
            _bessel_kernel_generic,
            out_shape=out_shapes,
            grid_spec=pltpu.PrefetchScalarGridSpec(
                num_scalar_prefetch=0,
                grid=grid,
                in_specs=[
                    pl.BlockSpec(memory_space=pltpu.MemorySpace.SMEM),
                    x_spec,
                ],
                out_specs=[emb_spec, cut_spec],
            ),
            compiler_params=cparams,
            cost_estimate=cost,
        )(w1d, x2d)

    # Pure reshapes (collapse trailing dims) + trim the <=127 padded edges.
    emb = emb3.reshape(B, E_pad)[:, :E]           # [B, E] lane-dense
    cut = cut2.reshape(E_pad)[:E]                 # [E]
    return emb, cut


def _weights_are_default(bessel_weights, num_bessels: int) -> bool:
    """True iff weights are concretely equal to linspace(1..B) (fast path)."""
    try:
        w = np.asarray(jax.device_get(bessel_weights), dtype=np.float64).reshape(-1)
    except Exception:   # traced weights (e.g. trainable, under an outer jit)
        return False
    if w.shape[0] != num_bessels:
        return False
    return bool(np.allclose(w, np.arange(1, num_bessels + 1, dtype=np.float64)))


def bessel_edge_length_encoding(
    x,
    bessel_weights,
    *,
    tile_edges: int = 32768,
    out_dtype=jnp.float32,
    lane_dense_output: bool = True,
):
    """Forward of nequip's BesselEdgeLengthEncoding.

    Args:
      x: [E, 1] normalized edge lengths (float32).
      bessel_weights: [1, B] bessel weights (default linspace(1, B, B)).
      tile_edges: edges per grid step (rounded to a multiple of 1024).
      lane_dense_output:
        True  -> (edge_embedding [B, E], edge_cutoff [E])   -- no transpose;
                 fold the [E, B] view into the consumer (e.g. dot_general
                 dimension numbers) instead of re-writing B*E to HBM.
        False -> (edge_embedding [E, B], edge_cutoff [E, 1]) -- module layout
                 (adds one extra HBM pass for the transpose).
    """
    E = x.shape[0]
    B = bessel_weights.shape[-1]
    assert x.shape == (E, 1)

    sublanes = max(8, _round_up(max(int(tile_edges), _LANES) // _LANES, 8))
    use_rec = _weights_are_default(bessel_weights, B)

    emb, cut = _encode_lane_dense(
        x, bessel_weights, sublanes=sublanes,
        use_recurrence=use_rec, out_dtype=out_dtype,
    )
    if lane_dense_output:
        return emb, cut
    # Compatibility path: module layout (costs one extra pass over B*E).
    return emb.T, cut[:, None]


def _reference(x, w):
    """Pure-JAX reference matching the PyTorch module ([E, B], [E, 1])."""
    bessel = jnp.sinc(x * w) * w
    p = _CUTOFF_P
    cutoff = (
        1.0
        - ((p + 1) * (p + 2) / 2.0) * x ** p
        + (p * (p + 2)) * x ** (p + 1)
        - (p * (p + 1) / 2.0) * x ** (p + 2)
    ) * (x < 1.0)
    return bessel * cutoff, cutoff


if __name__ == "__main__":
    num_edges = 100          # deliberately NOT a multiple of 128
    num_bessels = 8

    key = jax.random.PRNGKey(0)
    x = jax.random.uniform(key, (num_edges, 1), dtype=jnp.float32)
    x = x.at[0, 0].set(0.0)       # sinc(0) special case
    x = x.at[1, 0].set(1.25)      # beyond the cutoff radius

    # Non-trainable default: torch.linspace(1, B, B)[None, :]
    bessel_weights = jnp.linspace(
        1.0, float(num_bessels), num_bessels, dtype=jnp.float32
    )[None, :]

    ref_emb, ref_cut = _reference(x, bessel_weights)

    # 1) Fast (Chebyshev-recurrence) path, lane-dense output [B, E] / [E].
    emb_bd, cut_e = bessel_edge_length_encoding(x, bessel_weights)
    jax.block_until_ready(emb_bd)
    jax.block_until_ready(cut_e)
    assert emb_bd.shape == (num_bessels, num_edges)
    assert cut_e.shape == (num_edges,)
    assert jnp.allclose(emb_bd, ref_emb.T, atol=1e-5, rtol=1e-5)
    assert jnp.allclose(cut_e, ref_cut[:, 0], atol=1e-5, rtol=1e-5)

    # 2) Module-layout compatibility path ([E, B], [E, 1]).
    emb, cut = bessel_edge_length_encoding(
        x, bessel_weights, lane_dense_output=False
    )
    jax.block_until_ready(emb)
    assert emb.shape == (num_edges, num_bessels)
    assert cut.shape == (num_edges, 1)
    assert jnp.allclose(emb, ref_emb, atol=1e-5, rtol=1e-5)
    assert jnp.allclose(cut, ref_cut, atol=1e-5, rtol=1e-5)

    # 3) Generic path (weights not exactly 1..B, e.g. trainable).
    w_trained = bessel_weights * 1.1
    emb2_bd, cut2_e = bessel_edge_length_encoding(x, w_trained)
    jax.block_until_ready(emb2_bd)
    ref2_emb, ref2_cut = _reference(x, w_trained)
    assert jnp.allclose(emb2_bd, ref2_emb.T, atol=1e-5, rtol=1e-5)
    assert jnp.allclose(cut2_e, ref2_cut[:, 0], atol=1e-5, rtol=1e-5)

    print("KERNEL_OK")
</pallas_src>

<mosaic_0001>
module attributes {stable_mosaic.version = 11 : i64} {
  func.func @_bessel_kernel_rec(%arg0: i32, %arg1: memref<8x128xf32, #tpu.memory_space<vmem>>, %arg2: memref<8x8x128xf32, #tpu.memory_space<vmem>>, %arg3: memref<8x128xf32, #tpu.memory_space<vmem>>) attributes {dimension_semantics = [#tpu.dimension_semantics<parallel>], iteration_bounds = array<i64: 1>, scalar_prefetch = 0 : i64, scratch_operands = 0 : i64, tpu.core_type = #tpu.core_type<tc>, window_params = [{transform_indices = @transform_0, window_bounds = array<i64: 8, 128>}, {transform_indices = @transform_1, window_bounds = array<i64: 8, 8, 128>}, {transform_indices = @transform_2, window_bounds = array<i64: 8, 128>}]} {
    %c0 = arith.constant 0 : index
    %c0_0 = arith.constant 0 : index
    %0 = vector.load %arg1[%c0, %c0_0] : memref<8x128xf32, #tpu.memory_space<vmem>>, vector<8x128xf32>
    %1 = arith.mulf %0, %0 : vector<8x128xf32>
    %2 = arith.mulf %1, %0 : vector<8x128xf32>
    %3 = arith.mulf %2, %2 : vector<8x128xf32>
    %cst = arith.constant 2.800000e+01 : f32
    %4 = vector.broadcast %cst : f32 to vector<8x128xf32>
    %5 = arith.mulf %4, %3 : vector<8x128xf32>
    %cst_1 = arith.constant 1.000000e+00 : f32
    %6 = vector.broadcast %cst_1 : f32 to vector<8x128xf32>
    %7 = arith.subf %6, %5 : vector<8x128xf32>
    %8 = arith.mulf %3, %0 : vector<8x128xf32>
    %cst_2 = arith.constant 4.800000e+01 : f32
    %9 = vector.broadcast %cst_2 : f32 to vector<8x128xf32>
    %10 = arith.mulf %9, %8 : vector<8x128xf32>
    %11 = arith.addf %7, %10 : vector<8x128xf32>
    %12 = arith.mulf %3, %1 : vector<8x128xf32>
    %cst_3 = arith.constant 2.100000e+01 : f32
    %13 = vector.broadcast %cst_3 : f32 to vector<8x128xf32>
    %14 = arith.mulf %13, %12 : vector<8x128xf32>
    %15 = arith.subf %11, %14 : vector<8x128xf32>
    %cst_4 = arith.constant 1.000000e+00 : f32
    %16 = vector.broadcast %cst_4 : f32 to vector<8x128xf32>
    %17 = arith.cmpf olt, %0, %16 : vector<8x128xf32>
    %cst_5 = arith.constant 0.000000e+00 : f32
    %18 = vector.broadcast %cst_5 : f32 to vector<8x128xf32>
    %19 = arith.select %17, %15, %18 : vector<8x128xi1>, vector<8x128xf32>
    %c0_6 = arith.constant 0 : index
    %c0_7 = arith.constant 0 : index
    %20 = vector.load %arg3[%c0_6, %c0_7] : memref<8x128xf32, #tpu.memory_space<vmem>>, vector<8x128xf32>
    tpu.vector_store %arg3[%c0_6, %c0_7], %19 {strides = array<i32>} : memref<8x128xf32, #tpu.memory_space<vmem>>, vector<8x128xf32>,
    %cst_8 = arith.constant 0.000000e+00 : f32
    %21 = vector.broadcast %cst_8 : f32 to vector<8x128xf32>
    %22 = arith.cmpf oeq, %0, %21 : vector<8x128xf32>
    %cst_9 = arith.constant 1.000000e+00 : f32
    %23 = vector.broadcast %cst_9 : f32 to vector<8x128xf32>
    %24 = arith.select %22, %23, %0 : vector<8x128xi1>, vector<8x128xf32>
    %cst_10 = arith.constant 3.14159274 : f32
    %25 = vector.broadcast %cst_10 : f32 to vector<8x128xf32>
    %26 = arith.mulf %25, %24 : vector<8x128xf32>
    %27 = tpu.reciprocal %26 : vector<8x128xf32> -> vector<8x128xf32>
    %28 = arith.mulf %19, %27 : vector<8x128xf32>
    %cst_11 = arith.constant 3.14159274 : f32
    %29 = vector.broadcast %cst_11 : f32 to vector<8x128xf32>
    %30 = arith.mulf %29, %0 : vector<8x128xf32>
    %cst_12 = arith.constant 0.000000e+00 : f32
    %31 = vector.broadcast %cst_12 : f32 to vector<8x128xf32>
    %32 = math.sin %30 : vector<8x128xf32>
    %33 = math.cos %30 : vector<8x128xf32>
    %cst_13 = arith.constant 2.000000e+00 : f32
    %34 = vector.broadcast %cst_13 : f32 to vector<8x128xf32>
    %35 = arith.mulf %34, %33 : vector<8x128xf32>
    %cst_14 = arith.constant 1.000000e+00 : f32
    %36 = vector.broadcast %cst_14 : f32 to vector<8x128xf32>
    %37 = arith.mulf %36, %19 : vector<8x128xf32>
    %38 = arith.mulf %32, %28 : vector<8x128xf32>
    %39 = arith.select %22, %37, %38 : vector<8x128xi1>, vector<8x128xf32>
    %c0_15 = arith.constant 0 : index
    %c0_16 = arith.constant 0 : index
    %c0_17 = arith.constant 0 : index
    %40 = vector.load %arg2[%c0_15, %c0_16, %c0_17] : memref<8x8x128xf32, #tpu.memory_space<vmem>>, vector<1x8x128xf32>
    %41 = vector.shape_cast %40 : vector<1x8x128xf32> to vector<8x128xf32>
    %42 = vector.shape_cast %39 : vector<8x128xf32> to vector<1x8x128xf32>
    tpu.vector_store %arg2[%c0_15, %c0_16, %c0_17], %42 {strides = array<i32>} : memref<8x8x128xf32, #tpu.memory_space<vmem>>, vector<1x8x128xf32>,
    %43 = arith.mulf %35, %32 : vector<8x128xf32>
    %44 = arith.subf %43, %31 : vector<8x128xf32>
    %cst_18 = arith.constant 2.000000e+00 : f32
    %45 = vector.broadcast %cst_18 : f32 to vector<8x128xf32>
    %46 = arith.mulf %45, %19 : vector<8x128xf32>
    %47 = arith.mulf %44, %28 : vector<8x128xf32>
    %48 = arith.select %22, %46, %47 : vector<8x128xi1>, vector<8x128xf32>
    %c1 = arith.constant 1 : index
    %c0_19 = arith.constant 0 : index
    %c0_20 = arith.constant 0 : index
    %49 = vector.load %arg2[%c1, %c0_19, %c0_20] : memref<8x8x128xf32, #tpu.memory_space<vmem>>, vector<1x8x128xf32>
    %50 = vector.shape_cast %49 : vector<1x8x128xf32> to vector<8x128xf32>
    %51 = vector.shape_cast %48 : vector<8x128xf32> to vector<1x8x128xf32>
    tpu.vector_store %arg2[%c1, %c0_19, %c0_20], %51 {strides = array<i32>} : memref<8x8x128xf32, #tpu.memory_space<vmem>>, vector<1x8x128xf32>,
    %52 = arith.mulf %35, %44 : vector<8x128xf32>
    %53 = arith.subf %52, %32 : vector<8x128xf32>
    %cst_21 = arith.constant 3.000000e+00 : f32
    %54 = vector.broadcast %cst_21 : f32 to vector<8x128xf32>
    %55 = arith.mulf %54, %19 : vector<8x128xf32>
    %56 = arith.mulf %53, %28 : vector<8x128xf32>
    %57 = arith.select %22, %55, %56 : vector<8x128xi1>, vector<8x128xf32>
    %c2 = arith.constant 2 : index
    %c0_22 = arith.constant 0 : index
    %c0_23 = arith.constant 0 : index
    %58 = vector.load %arg2[%c2, %c0_22, %c0_23] : memref<8x8x128xf32, #tpu.memory_space<vmem>>, vector<1x8x128xf32>
    %59 = vector.shape_cast %58 : vector<1x8x128xf32> to vector<8x128xf32>
    %60 = vector.shape_cast %57 : vector<8x128xf32> to vector<1x8x128xf32>
    tpu.vector_store %arg2[%c2, %c0_22, %c0_23], %60 {strides = array<i32>} : memref<8x8x128xf32, #tpu.memory_space<vmem>>, vector<1x8x128xf32>,
    %61 = arith.mulf %35, %53 : vector<8x128xf32>
    %62 = arith.subf %61, %44 : vector<8x128xf32>
    %cst_24 = arith.constant 4.000000e+00 : f32
    %63 = vector.broadcast %cst_24 : f32 to vector<8x128xf32>
    %64 = arith.mulf %63, %19 : vector<8x128xf32>
    %65 = arith.mulf %62, %28 : vector<8x128xf32>
    %66 = arith.select %22, %64, %65 : vector<8x128xi1>, vector<8x128xf32>
    %c3 = arith.constant 3 : index
    %c0_25 = arith.constant 0 : index
    %c0_26 = arith.constant 0 : index
    %67 = vector.load %arg2[%c3, %c0_25, %c0_26] : memref<8x8x128xf32, #tpu.memory_space<vmem>>, vector<1x8x128xf32>
    %68 = vector.shape_cast %67 : vector<1x8x128xf32> to vector<8x128xf32>
    %69 = vector.shape_cast %66 : vector<8x128xf32> to vector<1x8x128xf32>
    tpu.vector_store %arg2[%c3, %c0_25, %c0_26], %69 {strides = array<i32>} : memref<8x8x128xf32, #tpu.memory_space<vmem>>, vector<1x8x128xf32>,
    %70 = arith.mulf %35, %62 : vector<8x128xf32>
    %71 = arith.subf %70, %53 : vector<8x128xf32>
    %cst_27 = arith.constant 5.000000e+00 : f32
    %72 = vector.broadcast %cst_27 : f32 to vector<8x128xf32>
    %73 = arith.mulf %72, %19 : vector<8x128xf32>
    %74 = arith.mulf %71, %28 : vector<8x128xf32>
    %75 = arith.select %22, %73, %74 : vector<8x128xi1>, vector<8x128xf32>
    %c4 = arith.constant 4 : index
    %c0_28 = arith.constant 0 : index
    %c0_29 = arith.constant 0 : index
    %76 = vector.load %arg2[%c4, %c0_28, %c0_29] : memref<8x8x128xf32, #tpu.memory_space<vmem>>, vector<1x8x128xf32>
    %77 = vector.shape_cast %76 : vector<1x8x128xf32> to vector<8x128xf32>
    %78 = vector.shape_cast %75 : vector<8x128xf32> to vector<1x8x128xf32>
    tpu.vector_store %arg2[%c4, %c0_28, %c0_29], %78 {strides = array<i32>} : memref<8x8x128xf32, #tpu.memory_space<vmem>>, vector<1x8x128xf32>,
    %79 = arith.mulf %35, %71 : vector<8x128xf32>
    %80 = arith.subf %79, %62 : vector<8x128xf32>
    %cst_30 = arith.constant 6.000000e+00 : f32
    %81 = vector.broadcast %cst_30 : f32 to vector<8x128xf32>
    %82 = arith.mulf %81, %19 : vector<8x128xf32>
    %83 = arith.mulf %80, %28 : vector<8x128xf32>
    %84 = arith.select %22, %82, %83 : vector<8x128xi1>, vector<8x128xf32>
    %c5 = arith.constant 5 : index
    %c0_31 = arith.constant 0 : index
    %c0_32 = arith.constant 0 : index
    %85 = vector.load %arg2[%c5, %c0_31, %c0_32] : memref<8x8x128xf32, #tpu.memory_space<vmem>>, vector<1x8x128xf32>
    %86 = vector.shape_cast %85 : vector<1x8x128xf32> to vector<8x128xf32>
    %87 = vector.shape_cast %84 : vector<8x128xf32> to vector<1x8x128xf32>
    tpu.vector_store %arg2[%c5, %c0_31, %c0_32], %87 {strides = array<i32>} : memref<8x8x128xf32, #tpu.memory_space<vmem>>, vector<1x8x128xf32>,
    %88 = arith.mulf %35, %80 : vector<8x128xf32>
    %89 = arith.subf %88, %71 : vector<8x128xf32>
    %cst_33 = arith.constant 7.000000e+00 : f32
    %90 = vector.broadcast %cst_33 : f32 to vector<8x128xf32>
    %91 = arith.mulf %90, %19 : vector<8x128xf32>
    %92 = arith.mulf %89, %28 : vector<8x128xf32>
    %93 = arith.select %22, %91, %92 : vector<8x128xi1>, vector<8x128xf32>
    %c6 = arith.constant 6 : index
    %c0_34 = arith.constant 0 : index
    %c0_35 = arith.constant 0 : index
    %94 = vector.load %arg2[%c6, %c0_34, %c0_35] : memref<8x8x128xf32, #tpu.memory_space<vmem>>, vector<1x8x128xf32>
    %95 = vector.shape_cast %94 : vector<1x8x128xf32> to vector<8x128xf32>
    %96 = vector.shape_cast %93 : vector<8x128xf32> to vector<1x8x128xf32>
    tpu.vector_store %arg2[%c6, %c0_34, %c0_35], %96 {strides = array<i32>} : memref<8x8x128xf32, #tpu.memory_space<vmem>>, vector<1x8x128xf32>,
    %97 = arith.mulf %35, %89 : vector<8x128xf32>
    %98 = arith.subf %97, %80 : vector<8x128xf32>
    %cst_36 = arith.constant 8.000000e+00 : f32
    %99 = vector.broadcast %cst_36 : f32 to vector<8x128xf32>
    %100 = arith.mulf %99, %19 : vector<8x128xf32>
    %101 = arith.mulf %98, %28 : vector<8x128xf32>
    %102 = arith.select %22, %100, %101 : vector<8x128xi1>, vector<8x128xf32>
    %c7 = arith.constant 7 : index
    %c0_37 = arith.constant 0 : index
    %c0_38 = arith.constant 0 : index
    %103 = vector.load %arg2[%c7, %c0_37, %c0_38] : memref<8x8x128xf32, #tpu.memory_space<vmem>>, vector<1x8x128xf32>
    %104 = vector.shape_cast %103 : vector<1x8x128xf32> to vector<8x128xf32>
    %105 = vector.shape_cast %102 : vector<8x128xf32> to vector<1x8x128xf32>
    tpu.vector_store %arg2[%c7, %c0_37, %c0_38], %105 {strides = array<i32>} : memref<8x8x128xf32, #tpu.memory_space<vmem>>, vector<1x8x128xf32>,
    return
  }
  func.func @transform_0(%arg0: i32) -> (i32, i32) {
    %c0_i32 = arith.constant 0 : i32
    %c0_i32_0 = arith.constant 0 : i32
    return %arg0, %c0_i32 : i32, i32
  }
  func.func @transform_1(%arg0: i32) -> (i32, i32, i32) {
    %c0_i32 = arith.constant 0 : i32
    %c0_i32_0 = arith.constant 0 : i32
    %c0_i32_1 = arith.constant 0 : i32
    return %c0_i32, %arg0, %c0_i32_0 : i32, i32, i32
  }
  func.func @transform_2(%arg0: i32) -> (i32, i32) {
    %c0_i32 = arith.constant 0 : i32
    %c0_i32_0 = arith.constant 0 : i32
    return %arg0, %c0_i32 : i32, i32
  }
}

</mosaic_0001>

<llo_original>
// kernel: _encode_lane_dense.1
$region0: #{_encode_lane_dense.1}
  #allocation0 [shape = 'u32[]', space=smem, size = 0x4, offset = 0x4, fixed_abs, tag = 'smem constant byte address 0x4 - core index']
  #allocation1 [shape = 'u32[144,128]{1,0:T(1,128)}', space=vmem, size = 0x12000, scoped, tag = 'internal scratch']
  #allocation5 [shape = 's32[]', space=sflag, size = 0x4, offset = 0, fixed_abs, tag = 'sflag constant byte address 0x0 - dummy sync flag']
  %s0 = inlined_call_operand.vmem [shape: f32[1,128], index: 0, kind: input, shape index: {}]
  %s1 = inlined_call_operand.hbm [shape: f32[8,1,128], index: 1, kind: output, shape index: {0}]
  %s2 = inlined_call_operand.vmem [shape: f32[1,128], index: 2, kind: output, shape index: {1}]
  %3 = xla_tuple %s1, %s2
  %s4 = sld [smem:[#allocation0]]
  $region52: #{_encode_lane_dense.1} parent=0
    _
  %s6 = ssub.s32 1, %s4
  %s7 = scalar_select 0, %s6, %s4
  $region1: #{_encode_lane_dense.1} parent=0
    #allocation2 [shape = 'u8[32768]{0}', space=vmem, size = 0x8000, scoped, tag = 'output window, operand 0, single buffered']
    #allocation3 [shape = 's32[1]{0}', space=sflag, size = 0x4, scoped, tag = 'scoped memory for _encode_lane_dense.1']
    #allocation4 [shape = 'u8[4096]{0}', space=vmem, size = 0x1000, scoped, tag = 'output window, operand 1, single buffered']
    %8 = vsyncpa [#allocation3], 0
    // Predicated region
    $region2: #{_encode_lane_dense.1} parent=1 // pred_check
      _
    $region3: #{_encode_lane_dense.1} parent=1 // pred_check_branch
      %10 = sbr.rel (0) target = $region5
    $region4: #{_encode_lane_dense.1} parent=1 // pred_region
      _
    $region5: #{_encode_lane_dense.1} parent=1 // pred_fallthru
      _
    %v11 = vld [vmem:[%s0] sm:$0xff]
    %v12 = vmul.f32 %v11, %v11
    %v13 = vmul.f32 %v12, %v11
    %v14 = vmul.f32 %v13, %v13
    %v15 = vmul.f32 %v14, 28.0
    %v16 = vsub.f32 1.0, %v15
    %v17 = vmul.f32 %v14, %v11
    %v18 = vmul.f32 %v17, 48.0
    %v19 = vadd.f32 %v16, %v18
    %v20 = vmul.f32 %v14, %v12
    %v21 = vmul.f32 %v20, 21.0
    %v22 = vsub.f32 %v19, %v21
    %vm23 = vcmp.lt.f32.partialorder %v11, 1.0
    %v24 = vsel %vm23, %v22, 0.0
    %25 = vst [vmem:[#allocation4] sm:$0xff] %v24
    %vm26 = vcmp.eq.f32.partialorder %v11, 0.0
    %v27 = vsel %vm26, 1.0, %v11
    %v28 = vmul.f32 %v27, 3.1415927
    %v29 = vrcp.pop %v28
    %v30 = vmul.f32 %v24, %v29
    %v31 = vmul.f32 %v11, 3.1415927
    %v32 = vand.u32 2147483647, %v31
    %vm33 = vcmp.le.f32.partialorder %v32, 0.7853982
    %vm34 = vcmp.lt.s32.totalorder %v31, 0
    %v35 = vand.u32 %v31, 2139095040
    %v36 = vshrl.u32 %v35, 23
    %v37 = vsub.s32 %v36, 127
    %v38 = vand.u32 2147483647, %v31
    %v39 = vand.u32 %v38, 8388607
    %v40 = vor.u32 %v39, 8388608
    %v41 = vsub.s32 0, %v40
    %v42 = vadd.s32 %v37, 1
    %vm43 = vcmp.gt.s32.totalorder %v42, 0
    %v44 = vsel %vm43, %v42, 0
    %v45 = vshrl.u32 %v44, 5
    %v46 = vand.u32 %v44, 31
    %v47 = vsub.s32 32, %v46
    %v48 = vshrl.u32 683565275, %v47
    %v49 = vshll.u32 683565275, %v46
    %v50 = vshrl.u32 2475754826, %v47
    %v51 = vor.u32 %v49, %v50
    %v52 = vshll.u32 2475754826, %v46
    %v53 = vshrl.u32 2131351028, %v47
    %v54 = vor.u32 %v52, %v53
    %v55 = vshll.u32 2131351028, %v46
    %v56 = vshrl.u32 2102212464, %v47
    %v57 = vor.u32 %v55, %v56
    %v58 = vshll.u32 2102212464, %v46
    %v59 = vshrl.u32 920167782, %v47
    %v60 = vor.u32 %v58, %v59
    %v61 = vshll.u32 920167782, %v46
    %v62 = vshrl.u32 1326507024, %v47
    %v63 = vor.u32 %v61, %v62
    %vm64 = vcmp.lt.s32.totalorder %v45, 1
    %vm65 = vcmp.lt.s32.totalorder %v45, 2
    %vm66 = vcmp.lt.s32.totalorder %v45, 3
    %vm67 = vcmp.lt.s32.totalorder %v45, 4
    %v68 = vsel %vm64, %v48, %v51
    %v69 = vsel %vm67, %v57, 2102212464
    %v70 = vsel %vm66, %v54, %v69
    %v71 = vsel %vm65, %v68, %v70
    %v72 = vsel %vm64, %v51, %v54
    %v73 = vsel %vm67, %v60, 920167782
    %v74 = vsel %vm66, %v57, %v73
    %v75 = vsel %vm65, %v72, %v74
    %v76 = vsel %vm64, %v54, %v57
    %v77 = vsel %vm67, %v63, 1326507024
    %v78 = vsel %vm66, %v60, %v77
    %v79 = vsel %vm65, %v76, %v78
    %v80 = vshll.u32 %v40, 8
    %v81 = vmul.u32.u64.compose %v80, %v79
    %v82 = vextract.low.u32 %v81
    %v83 = vextract.high.u32 %v81
    %v84 = vmul.u32.u64.compose %v80, %v75
    %v85 = vextract.low.u32 %v84
    %v86 = vextract.high.u32 %v84
    %v87 = vmul.u32 %v80, %v71
    %v88 = vadd.s32 %v83, %v85
    %vm89 = vc.u32 %v83, %v85
    %v90 = vadd.s32 %v86, 1
    %v91 = vsel %vm89, %v90, %v86
    %v92 = vadd.s32 %v87, %v91
    %v93 = vadd.s32 %v92, 536870912
    %v94 = vshrl.u32 %v93, 30
    %v95 = vshll.u32 %v94, 30
    %v96 = vsub.s32 %v92, %v95
    %vm97 = vcmp.lt.s32.totalorder %v96, 0
    %v98 = vsub.s32 0, %v96
    %v99 = vsel %vm97, %v98, %v96
    %v100 = vclz %v99
    %v101 = vsub.s32 %v100, 2
    %vm102 = vcmp.gt.s32.totalorder 0, %v101
    %v103 = vsel %vm102, 0, %v101
    %v104 = vsub.s32 32, %v103
    %v105 = vshll.u32 %v96, %v103
    %v106 = vshrl.u32 %v88, %v104
    %v107 = vor.u32 %v105, %v106
    %v108 = vsub.s32 4294967266, %v103
    %v109 = vadd.s32 %v108, 127
    %v110 = vshll.u32 %v109, 23
    %v111 = vor.u32 4788187, %v110
    %v112 = vand.u32 2147483647, %v111
    %v114 = vcvt.s32.f32 %v107
    %v115 = vmul.f32 %v114, %v112
    %v116 = vxor.u32 %v115, 2147483648
    %v117 = vsel %vm34, %v116, %v115
    %v118 = vsub.s32 4, %v94
    %v119 = vsel %vm34, %v118, %v94
    %v120 = vsel %vm33, %v31, %v117
    %v121 = vsel %vm33, 0, %v119
    %v122 = vcosq.f32.pop %v120
    %v123 = vsinq.f32.pop %v120
    %vm124 = vweird.f32 %v31
    %v125 = vadd.s32 %v121, 3
    %v126 = vand.u32 %v125, 3
    %vm127 = vcmp.lt.s32.totalorder %v126, 2
    %vm128 = vcmp.eq.s32.totalorder %v126, 0
    %v129 = vxor.u32 %v123, 2147483648
    %v130 = vsel %vm128, %v122, %v129
    %vm131 = vcmp.eq.s32.totalorder %v126, 2
    %v132 = vxor.u32 %v122, 2147483648
    %v133 = vsel %vm131, %v132, %v123
    %v134 = vsel %vm127, %v130, %v133
    %v135 = vsel %vm124, nan, %v134
    %v136 = vand.u32 2147483647, %v31
    %vm137 = vcmp.le.f32.partialorder %v136, 0.7853982
    %vm138 = vcmp.lt.s32.totalorder %v31, 0
    %v139 = vand.u32 %v31, 2139095040
    %v140 = vshrl.u32 %v139, 23
    %v141 = vsub.s32 %v140, 127
    %v142 = vand.u32 2147483647, %v31
    %v143 = vand.u32 %v142, 8388607
    %v144 = vor.u32 %v143, 8388608
    %v145 = vsub.s32 0, %v144
    %v146 = vadd.s32 %v141, 1
    %vm147 = vcmp.gt.s32.totalorder %v146, 0
    %v148 = vsel %vm147, %v146, 0
    %v149 = vshrl.u32 %v148, 5
    %v150 = vand.u32 %v148, 31
    %v151 = vsub.s32 32, %v150
    %v152 = vshrl.u32 683565275, %v151
    %v153 = vshll.u32 683565275, %v150
    %v154 = vshrl.u32 2475754826, %v151
    %v155 = vor.u32 %v153, %v154
    %v156 = vshll.u32 2475754826, %v150
    %v157 = vshrl.u32 2131351028, %v151
    %v158 = vor.u32 %v156, %v157
    %v159 = vshll.u32 2131351028, %v150
    %v160 = vshrl.u32 2102212464, %v151
    %v161 = vor.u32 %v159, %v160
    %v162 = vshll.u32 2102212464, %v150
    %v163 = vshrl.u32 920167782, %v151
    %v164 = vor.u32 %v162, %v163
    %v165 = vshll.u32 920167782, %v150
    %v166 = vshrl.u32 1326507024, %v151
    %v167 = vor.u32 %v165, %v166
    %vm168 = vcmp.lt.s32.totalorder %v149, 1
    %vm169 = vcmp.lt.s32.totalorder %v149, 2
    %vm170 = vcmp.lt.s32.totalorder %v149, 3
    %vm171 = vcmp.lt.s32.totalorder %v149, 4
    %v172 = vsel %vm168, %v152, %v155
    %v173 = vsel %vm171, %v161, 2102212464
    %v174 = vsel %vm170, %v158, %v173
    %v175 = vsel %vm169, %v172, %v174
    %v176 = vsel %vm168, %v155, %v158
    %v177 = vsel %vm171, %v164, 920167782
    %v178 = vsel %vm170, %v161, %v177
    %v179 = vsel %vm169, %v176, %v178
    %v180 = vsel %vm168, %v158, %v161
    %v181 = vsel %vm171, %v167, 1326507024
    %v182 = vsel %vm170, %v164, %v181
    %v183 = vsel %vm169, %v180, %v182
    %v184 = vshll.u32 %v144, 8
    %v185 = vmul.u32.u64.compose %v184, %v183
    %v186 = vextract.low.u32 %v185
    %v187 = vextract.high.u32 %v185
    %v188 = vmul.u32.u64.compose %v184, %v179
    %v189 = vextract.low.u32 %v188
    %v190 = vextract.high.u32 %v188
    %v191 = vmul.u32 %v184, %v175
    %v192 = vadd.s32 %v187, %v189
    %vm193 = vc.u32 %v187, %v189
    %v194 = vadd.s32 %v190, 1
    %v195 = vsel %vm193, %v194, %v190
    %v196 = vadd.s32 %v191, %v195
    %v197 = vadd.s32 %v196, 536870912
    %v198 = vshrl.u32 %v197, 30
    %v199 = vshll.u32 %v198, 30
    %v200 = vsub.s32 %v196, %v199
    %vm201 = vcmp.lt.s32.totalorder %v200, 0
    %v202 = vsub.s32 0, %v200
    %v203 = vsel %vm201, %v202, %v200
    %v204 = vclz %v203
    %v205 = vsub.s32 %v204, 2
    %vm206 = vcmp.gt.s32.totalorder 0, %v205
    %v207 = vsel %vm206, 0, %v205
    %v208 = vsub.s32 32, %v207
    %v209 = vshll.u32 %v200, %v207
    %v210 = vshrl.u32 %v192, %v208
    %v211 = vor.u32 %v209, %v210
    %v212 = vsub.s32 4294967266, %v207
    %v213 = vadd.s32 %v212, 127
    %v214 = vshll.u32 %v213, 23
    %v215 = vor.u32 4788187, %v214
    %v216 = vand.u32 2147483647, %v215
    %v218 = vcvt.s32.f32 %v211
    %v219 = vmul.f32 %v218, %v216
    %v220 = vxor.u32 %v219, 2147483648
    %v221 = vsel %vm138, %v220, %v219
    %v222 = vsub.s32 4, %v198
    %v223 = vsel %vm138, %v222, %v198
    %v224 = vsel %vm137, %v31, %v221
    %v225 = vsel %vm137, 0, %v223
    %v226 = vcosq.f32.pop %v224
    %v227 = vsinq.f32.pop %v224
    %vm228 = vweird.f32 %v31
    %v229 = vand.u32 %v225, 3
    %vm230 = vcmp.lt.s32.totalorder %v229, 2
    %vm231 = vcmp.eq.s32.totalorder %v229, 0
    %v232 = vxor.u32 %v227, 2147483648
    %v233 = vsel %vm231, %v226, %v232
    %vm234 = vcmp.eq.s32.totalorder %v229, 2
    %v235 = vxor.u32 %v226, 2147483648
    %v236 = vsel %vm234, %v235, %v227
    %v237 = vsel %vm230, %v233, %v236
    %v238 = vsel %vm228, nan, %v237
    %v239 = vmul.f32 %v238, 2.0
    %v240 = vmul.f32 %v135, %v30
    %v241 = vsel %vm26, %v24, %v240
    %242 = vst [vmem:[#allocation2] sm:$0xff] %v241
    %v243 = vmul.f32 %v239, %v135
    %v244 = vmul.f32 %v24, 2.0
    %v245 = vmul.f32 %v243, %v30
    %v246 = vsel %vm26, %v244, %v245
    %s247 = scalar_lea.vmem [#allocation2], 8
    %248 = vst [vmem:[%s247] sm:$0xff] %v246
    %v249 = vmul.f32 %v239, %v243
    %v250 = vsub.f32 %v249, %v135
    %v251 = vmul.f32 %v24, 3.0
    %v252 = vmul.f32 %v250, %v30
    %v253 = vsel %vm26, %v251, %v252
    %s254 = scalar_lea.vmem [#allocation2], 16
    %255 = vst [vmem:[%s254] sm:$0xff] %v253
    %v256 = vmul.f32 %v239, %v250
    %v257 = vsub.f32 %v256, %v243
    %v258 = vmul.f32 %v24, 4.0
    %v259 = vmul.f32 %v257, %v30
    %v260 = vsel %vm26, %v258, %v259
    %s261 = scalar_lea.vmem [#allocation2], 24
    %262 = vst [vmem:[%s261] sm:$0xff] %v260
    %v263 = vmul.f32 %v239, %v257
    %v264 = vsub.f32 %v263, %v250
    %v265 = vmul.f32 %v24, 5.0
    %v266 = vmul.f32 %v264, %v30
    %v267 = vsel %vm26, %v265, %v266
    %s268 = scalar_lea.vmem [#allocation2], 32
    %269 = vst [vmem:[%s268] sm:$0xff] %v267
    %v270 = vmul.f32 %v239, %v264
    %v271 = vsub.f32 %v270, %v257
    %v272 = vmul.f32 %v24, 6.0
    %v273 = vmul.f32 %v271, %v30
    %v274 = vsel %vm26, %v272, %v273
    %s275 = scalar_lea.vmem [#allocation2], 40
    %276 = vst [vmem:[%s275] sm:$0xff] %v274
    %v277 = vmul.f32 %v239, %v271
    %v278 = vsub.f32 %v277, %v264
    %v279 = vmul.f32 %v24, 7.0
    %v280 = vmul.f32 %v278, %v30
    %v281 = vsel %vm26, %v279, %v280
    %s282 = scalar_lea.vmem [#allocation2], 48
    %283 = vst [vmem:[%s282] sm:$0xff] %v281
    %v284 = vmul.f32 %v239, %v278
    %v285 = vsub.f32 %v284, %v271
    %v286 = vmul.f32 %v24, 8.0
    %v287 = vmul.f32 %v285, %v30
    %v288 = vsel %vm26, %v286, %v287
    %s289 = scalar_lea.vmem [#allocation2], 56
    %290 = vst [vmem:[%s289] sm:$0xff] %v288
    // Predicated region
    $region6: #{_encode_lane_dense.1} parent=1 // pred_check
      _
    $region7: #{_encode_lane_dense.1} parent=1 // pred_check_branch
      %292 = sbr.rel (0) target = $region9
    $region8: #{_encode_lane_dense.1} parent=1 // pred_region
      #allocation6 [shape = 'u32[6]{0}', space=smem, size = 0x18, scoped, tag = 'DMA stride descriptor']
      %s294 = ssub.s32 1024, 128
      %295 = vsyncadd [#allocation3], %s294
      %s297 = sshll.u32 1, 14
      %s298 = sxor.u32 4294967295, %s297
      %s301 = sshll.u32 7, 18
      %s302 = sxor.u32 4294967295, %s301
      %s303 = sand.u32 0, %s302
      %s305 = sor.u32 %s303, 0
      %s306 = sshll.u32 [#allocation2], 4
      %s307 = int_to_ptr.vmem [resolvable:$true] %s306
      %313 = sst [smem:[#allocation6]] 128
      %s314 = scalar_lea.smem [#allocation6], 1
      %315 = sst [smem:[%s314]] 16
      %s316 = scalar_lea.smem [#allocation6], 2
      %317 = sst [smem:[%s316]] 1
      %s318 = scalar_lea.smem [#allocation6], 3
      %319 = sst [smem:[%s318]] 16
      %s320 = scalar_lea.smem [#allocation6], 4
      %321 = sst [smem:[%s320]] 16
      %s322 = scalar_lea.smem [#allocation6], 5
      %323 = sst [smem:[%s322]] 1
      %325 = dma.general %s307, 128, %s1, [#allocation3], 131072, [#allocation6], %s305, 0
    $region9: #{_encode_lane_dense.1} parent=1 // pred_fallthru
      _
    // Predicated region
    $region10: #{_encode_lane_dense.1} parent=1 // pred_check
      _
    $region11: #{_encode_lane_dense.1} parent=1 // pred_check_branch
      %327 = sbr.rel (0) target = $region13
    $region12: #{_encode_lane_dense.1} parent=1 // pred_region
      // Predicated region
      $region14: #{_encode_lane_dense.1} parent=12 // pred_check
        _
      $region15: #{_encode_lane_dense.1} parent=12 // pred_check_branch
        %329 = sbr.rel (0) target = $region17
      $region16: #{_encode_lane_dense.1} parent=12 // pred_region
        // Predicated region
        $region18: #{_encode_lane_dense.1} parent=16 // pred_check
          _
        $region19: #{_encode_lane_dense.1} parent=16 // pred_check_branch
          %331 = sbr.rel target = $region21
        $region20: #{_encode_lane_dense.1} parent=16 // pred_region
          // Predicated region
          $region33: #{_encode_lane_dense.1} parent=20 // pred_check
            _
          $region34: #{_encode_lane_dense.1} parent=20 // pred_check_branch
            %347 = sbr.rel (0) target = $region36
          $region35: #{_encode_lane_dense.1} parent=20 // pred_region
            %s349 = ssub.s32 2, 1
            loop: start=0, step=1, limit=1
            $region37: #{_encode_lane_dense.1} parent=35 // loop_pre_header
              _
            $region38: #{_encode_lane_dense.1} parent=35 // loop_header
              %s351 = sphi 0, %s355
              %p352 = scmp.ge.s32.totalorder %s351, 1
              %s356 = sphi [#allocation4], [#allocation4]
              %s357 = sphi %s2, %s2
            $region39: #{_encode_lane_dense.1} parent=35 // loop_header_branch
              %354 = sbr.rel (%p352) target = $region43
            $region40: #{_encode_lane_dense.1} parent=35 // loop_body
              %v358 = vld [vmem:[%s356] sm:%s349]
              %359 = vst [vmem:[%s357] sm:%s349] %v358
            $region41: #{_encode_lane_dense.1} parent=35 // loop_footer
              %s355 = sadd.s32 1, %s351
            $region42: #{_encode_lane_dense.1} parent=35 // loop_footer_branch
              %350 = sbr.rel target = $region38
            $region43: #{_encode_lane_dense.1} parent=35 // loop_exit
              _
          $region36: #{_encode_lane_dense.1} parent=20 // pred_fallthru
            _
        $region21: #{_encode_lane_dense.1} parent=16 // pred_fallthru
          _
        // Predicated region
        $region22: #{_encode_lane_dense.1} parent=16 // pred_check
          _
        $region23: #{_encode_lane_dense.1} parent=16 // pred_check_branch
          %333 = sbr.rel (0) target = $region25
        $region24: #{_encode_lane_dense.1} parent=16 // pred_region
          %s335 = ssub.s32 2, 1
          loop: start=0, step=1, limit=1
          $region26: #{_encode_lane_dense.1} parent=24 // loop_pre_header
            _
          $region27: #{_encode_lane_dense.1} parent=24 // loop_header
            %s337 = sphi 0, %s341
            %p338 = scmp.ge.s32.totalorder %s337, 1
            %s342 = sphi [#allocation4], [#allocation4]
            %s343 = sphi %s2, %s2
          $region28: #{_encode_lane_dense.1} parent=24 // loop_header_branch
            %340 = sbr.rel (%p338) target = $region32
          $region29: #{_encode_lane_dense.1} parent=24 // loop_body
            %v344 = vld [vmem:[%s342] sm:%s335]
            %345 = vst [vmem:[%s343] sm:%s335] %v344
          $region30: #{_encode_lane_dense.1} parent=24 // loop_footer
            %s341 = sadd.s32 1, %s337
          $region31: #{_encode_lane_dense.1} parent=24 // loop_footer_branch
            %336 = sbr.rel target = $region27
          $region32: #{_encode_lane_dense.1} parent=24 // loop_exit
            _
        $region25: #{_encode_lane_dense.1} parent=16 // pred_fallthru
          _
      $region17: #{_encode_lane_dense.1} parent=12 // pred_fallthru
        _
      %360 = vnop
    $region13: #{_encode_lane_dense.1} parent=1 // pred_fallthru
      _
    // Predicated region
    $region44: #{_encode_lane_dense.1} parent=1 // pred_check
      _
    $region45: #{_encode_lane_dense.1} parent=1 // pred_check_branch
      %362 = sbr.rel (0) target = $region47
    $region46: #{_encode_lane_dense.1} parent=1 // pred_region
      %363 = dma.done [#allocation3], 1024
    $region47: #{_encode_lane_dense.1} parent=1 // pred_fallthru
      _
    // Predicated region
    $region48: #{_encode_lane_dense.1} parent=1 // pred_check
      _
    $region49: #{_encode_lane_dense.1} parent=1 // pred_check_branch
      %365 = sbr.rel (0) target = $region51
    $region50: #{_encode_lane_dense.1} parent=1 // pred_region
      _
    $region51: #{_encode_lane_dense.1} parent=1 // pred_fallthru
      _
    %366 = vsyncpa [#allocation3], 1

</llo_original>
